<compile_context>
chip_gen: v7x
topology: tpu7x:2x2x1
jax: 0.10.0
libtpu: 0.0.40
codegen_flags: <defaults>
</compile_context>

<pallas_src>
import functools
import math

import jax
import jax.numpy as jnp
from jax.experimental import pallas as pl
from jax.experimental.pallas import tpu as pltpu

LANES = 128
ROW_BLOCK_MAX = 8192   # rows DMA'd per grid step (8192*128*4B = 4 MiB per f32 input buffer)
CHUNK_ROWS = 1024      # rows per in-kernel accumulation chunk (bounds f32 temporaries)


def _accumulate_block(p_ref, t_ref, o_ref, row_bound, *, row_block, chunk, masked):
    """Accumulate this block's partial sums into o_ref.

    Walks `chunk`-row sub-slices of the (row_block, LANES) VMEM block so f32
    temporaries never scale with row_block.  `row_bound` (traced scalar) is the
    number of valid rows in the block; only the masked variant uses it.
    """
    n_chunks = row_block // chunk

    def body(j, carry):
        prod_acc, psum_acc = carry
        r0 = pl.multiple_of(j * chunk, chunk)
        p = p_ref[pl.ds(r0, chunk), :].astype(jnp.float32)
        t = t_ref[pl.ds(r0, chunk), :].astype(jnp.float32)
        if masked:
            # Ragged tail: zero rows past the valid extent BEFORE they feed the
            # arithmetic (garbage/NaN in the partial DMA region stays inert).
            # Block offset is folded into the bound -> compare against a scalar.
            row_iota = jax.lax.broadcasted_iota(jnp.int32, (chunk, LANES), 0)
            valid = row_iota < (row_bound - r0)
            p = jnp.where(valid, p, 0.0)
            t = jnp.where(valid, t, 0.0)
        # Fold the row dimension down to one (8,128) vreg-shaped slab per
        # quantity: pure VPU adds, no cross-lane reduce in the hot loop.
        prod_acc = prod_acc + (p * t).reshape(chunk // 8, 8, LANES).sum(axis=0)
        psum_acc = psum_acc + (p + t).reshape(chunk // 8, 8, LANES).sum(axis=0)
        return prod_acc, psum_acc

    zero = jnp.zeros((8, LANES), jnp.float32)
    prod_acc, psum_acc = jax.lax.fori_loop(0, n_chunks, body, (zero, zero),
                                           unroll=True)
    o_ref[0, 0] += prod_acc   # intersection partials
    o_ref[0, 1] += psum_acc   # sum(pred) + sum(true) partials


def _iou_partial_kernel(p_ref, t_ref, o_ref, *, rows_valid, row_block, chunk,
                        blocks_per_core, total_blocks):
    c = pl.program_id(0)   # core axis ("parallel")
    i = pl.program_id(1)   # row-block stream axis ("arbitrary")

    @pl.when(i == 0)
    def _():
        o_ref[...] = jnp.zeros_like(o_ref)

    blk = c * blocks_per_core + i          # global (un-clamped) block index
    row0 = blk * row_block
    is_full = row0 + row_block <= rows_valid

    # Fast path: fully in-bounds block (the overwhelmingly common case) --
    # no mask work at all.
    @pl.when(is_full)
    def _():
        _accumulate_block(p_ref, t_ref, o_ref, row_block,
                          row_block=row_block, chunk=chunk, masked=False)

    # Slow path: the single ragged tail block per core.  Clamped duplicate
    # blocks from an uneven per-core split (blk >= total_blocks) skip compute
    # entirely and cost only their DMA.
    @pl.when(jnp.logical_and(jnp.logical_not(is_full), blk < total_blocks))
    def _():
        _accumulate_block(p_ref, t_ref, o_ref, rows_valid - row0,
                          row_block=row_block, chunk=chunk, masked=True)


def _num_tensorcores() -> int:
    """TensorCores addressable by a 'parallel' grid axis on this device."""
    try:
        dev = jax.devices()[0]
        if dev.platform != "tpu":
            return 1
        kind = str(getattr(dev, "device_kind", "")).lower()
    except Exception:
        return 1
    # Megacore (v4/v5p) and v7x expose two TensorCores per device; on
    # single-TC chips (v2/v3/v5e/v6e) a 2-way split would just serialize and
    # waste a duplicate block, so stay at 1 there.
    if any(tag in kind for tag in ("v4", "v5p", "v7", "7x")):
        return 2
    return 1


@jax.jit
def iou_loss(y_pred, y_true):
    assert y_pred.shape == y_true.shape
    n = math.prod(y_pred.shape)
    if n == 0:
        # sums are all zero -> iou = eps/eps = 1 -> loss = 0 (matches reference).
        return jnp.asarray(0.0, jnp.float32)

    p_flat = jnp.reshape(y_pred, (n,))
    t_flat = jnp.reshape(y_true, (n,))

    # Lane-dense (rows, 128) view needs n % 128 == 0.  The common aligned case
    # is a zero-copy reshape; only a ragged <128-element tail pads (a fully
    # copy-free ragged path would need a manual 1-D DMA kernel -- not worth it
    # for <128 trailing elements).
    rem = n % LANES
    if rem:
        p_flat = jnp.pad(p_flat, (0, LANES - rem))
        t_flat = jnp.pad(t_flat, (0, LANES - rem))

    rows = p_flat.shape[0] // LANES
    p2 = p_flat.reshape(rows, LANES)
    t2 = t_flat.reshape(rows, LANES)

    # Largest sublane-aligned block <= ROW_BLOCK_MAX; above CHUNK_ROWS it is
    # rounded to a multiple of CHUNK_ROWS so the in-kernel chunk loop tiles it
    # exactly.
    row_block = min(ROW_BLOCK_MAX, max(8, (rows // 8) * 8))
    if row_block > CHUNK_ROWS:
        row_block = (row_block // CHUNK_ROWS) * CHUNK_ROWS
        chunk = CHUNK_ROWS
    else:
        chunk = row_block

    total_blocks = pl.cdiv(rows, row_block)
    n_cores = _num_tensorcores() if total_blocks >= 2 else 1
    blocks_per_core = pl.cdiv(total_blocks, n_cores)

    def in_map(c, i):
        blk = c * blocks_per_core + i
        # Clamp so an uneven split never names a block past the array; the
        # kernel skips compute for the duplicate (it only costs its DMA).
        return (jnp.minimum(blk, total_blocks - 1), 0)

    kernel = functools.partial(
        _iou_partial_kernel,
        rows_valid=rows,
        row_block=row_block,
        chunk=chunk,
        blocks_per_core=blocks_per_core,
        total_blocks=total_blocks,
    )

    in_bytes = (jnp.dtype(y_pred.dtype).itemsize +
                jnp.dtype(y_true.dtype).itemsize)
    cost = pl.CostEstimate(
        flops=3 * rows * LANES,
        transcendentals=0,
        bytes_accessed=rows * LANES * in_bytes + n_cores * 2 * 8 * LANES * 4,
    )

    partials = pl.pallas_call(
        kernel,
        out_shape=jax.ShapeDtypeStruct((n_cores, 2, 8, LANES), jnp.float32),
        grid_spec=pltpu.PrefetchScalarGridSpec(
            num_scalar_prefetch=0,
            grid=(n_cores, blocks_per_core),
            in_specs=[
                pl.BlockSpec((row_block, LANES), in_map),
                pl.BlockSpec((row_block, LANES), in_map),
            ],
            out_specs=pl.BlockSpec((1, 2, 8, LANES), lambda c, i: (c, 0, 0, 0)),
        ),
        compiler_params=pltpu.CompilerParams(
            dimension_semantics=("parallel", "arbitrary"),
            vmem_limit_bytes=40 * 1024 * 1024,
        ),
        cost_estimate=cost,
    )(p2, t2)

    # Tiny scalar finalize in the wrapper (also combines per-core partials).
    inter = jnp.sum(partials[:, 0])
    union = jnp.sum(partials[:, 1]) - inter
    return 1.0 - (inter + 1e-07) / (union + 1e-07)


def iou_loss_ref(y_pred, y_true):
    inter = jnp.sum(y_pred * y_true)
    union = jnp.sum(y_pred) + jnp.sum(y_true) - inter
    return 1.0 - (inter + 1e-07) / (union + 1e-07)


if __name__ == "__main__":
    key = jax.random.PRNGKey(0)
    k1, k2 = jax.random.split(key)
    # NCHW-like mask shapes (batch=2, channels=4, spatial=16x16)
    y_pred = jax.nn.sigmoid(jax.random.normal(k1, (2, 4, 16, 16), jnp.float32))
    y_true = (jax.random.uniform(k2, (2, 4, 16, 16)) > 0.5).astype(jnp.float32)

    loss = iou_loss(y_pred, y_true)
    jax.block_until_ready(loss)

    ref = iou_loss_ref(y_pred, y_true)
    assert jnp.allclose(loss, ref, rtol=1e-5, atol=1e-6), (loss, ref)
    print("KERNEL_OK")
</pallas_src>

<mosaic_0001>
module attributes {stable_mosaic.version = 11 : i64} {
  func.func @_iou_partial_kernel(%arg0: i32, %arg1: i32, %arg2: memref<16x128xf32, #tpu.memory_space<vmem>>, %arg3: memref<16x128xf32, #tpu.memory_space<vmem>>, %arg4: memref<1x2x8x128xf32, #tpu.memory_space<vmem>>) attributes {dimension_semantics = [#tpu.dimension_semantics<parallel>, #tpu.dimension_semantics<arbitrary>], iteration_bounds = array<i64: 1, 1>, scalar_prefetch = 0 : i64, scratch_operands = 0 : i64, tpu.core_type = #tpu.core_type<tc>, window_params = [{transform_indices = @transform_0, window_bounds = array<i64: 16, 128>}, {transform_indices = @transform_1, window_bounds = array<i64: 16, 128>}, {transform_indices = @transform_2, window_bounds = array<i64: 1, 2, 8, 128>}]} {
    %c0_i32 = arith.constant 0 : i32
    %0 = arith.cmpi eq, %arg1, %c0_i32 : i32
    %1 = arith.extui %0 : i1 to i32
    %c0_i32_0 = arith.constant 0 : i32
    %2 = arith.cmpi ne, %1, %c0_i32_0 : i32
    scf.if %2 {
      %cst = arith.constant 0.000000e+00 : f32
      %15 = vector.broadcast %cst : f32 to vector<1x2x8x128xf32>
      %c0 = arith.constant 0 : index
      %c0_6 = arith.constant 0 : index
      %c0_7 = arith.constant 0 : index
      %c0_8 = arith.constant 0 : index
      %16 = vector.load %arg4[%c0, %c0_6, %c0_7, %c0_8] : memref<1x2x8x128xf32, #tpu.memory_space<vmem>>, vector<1x2x8x128xf32>
      tpu.vector_store %arg4[%c0, %c0_6, %c0_7, %c0_8], %15 {strides = array<i32>} : memref<1x2x8x128xf32, #tpu.memory_space<vmem>>, vector<1x2x8x128xf32>,
    } else {
    }
    %c1_i32 = arith.constant 1 : i32
    %3 = arith.muli %arg0, %c1_i32 : i32
    %4 = arith.addi %3, %arg1 : i32
    %c16_i32 = arith.constant 16 : i32
    %5 = arith.muli %4, %c16_i32 : i32
    %c16_i32_1 = arith.constant 16 : i32
    %6 = arith.addi %5, %c16_i32_1 : i32
    %c16_i32_2 = arith.constant 16 : i32
    %7 = arith.cmpi sle, %6, %c16_i32_2 : i32
    %8 = arith.extui %7 : i1 to i32
    %c0_i32_3 = arith.constant 0 : i32
    %9 = arith.cmpi ne, %8, %c0_i32_3 : i32
    scf.if %9 {
      %cst = arith.constant 0.000000e+00 : f32
      %15 = vector.broadcast %cst : f32 to vector<8x128xf32>
      %c0_i32_6 = arith.constant 0 : i32
      %c16_i32_7 = arith.constant 16 : i32
      %16 = arith.muli %c0_i32_6, %c16_i32_7 : i32
      %17 = tpu.assume_multiple %16, 16 : i32
      %18 = arith.index_cast %17 : i32 to index
      %c0 = arith.constant 0 : index
      %19 = vector.load %arg2[%18, %c0] : memref<16x128xf32, #tpu.memory_space<vmem>>, vector<16x128xf32>
      %20 = arith.index_cast %17 : i32 to index
      %c0_8 = arith.constant 0 : index
      %21 = vector.load %arg3[%20, %c0_8] : memref<16x128xf32, #tpu.memory_space<vmem>>, vector<16x128xf32>
      %22 = arith.mulf %19, %21 : vector<16x128xf32>
      %23 = vector.shape_cast %22 : vector<16x128xf32> to vector<2x8x128xf32>
      %cst_9 = arith.constant dense<0.000000e+00> : vector<8x128xf32>
      %24 = vector.multi_reduction <add>, %23, %cst_9 [0] : vector<2x8x128xf32> to vector<8x128xf32>
      %25 = arith.addf %15, %24 : vector<8x128xf32>
      %26 = arith.addf %19, %21 : vector<16x128xf32>
      %27 = vector.shape_cast %26 : vector<16x128xf32> to vector<2x8x128xf32>
      %cst_10 = arith.constant dense<0.000000e+00> : vector<8x128xf32>
      %28 = vector.multi_reduction <add>, %27, %cst_10 [0] : vector<2x8x128xf32> to vector<8x128xf32>
      %29 = arith.addf %15, %28 : vector<8x128xf32>
      %c1_i32_11 = arith.constant 1 : i32
      %c0_12 = arith.constant 0 : index
      %c0_13 = arith.constant 0 : index
      %c0_14 = arith.constant 0 : index
      %c0_15 = arith.constant 0 : index
      %30 = vector.load %arg4[%c0_12, %c0_13, %c0_14, %c0_15] : memref<1x2x8x128xf32, #tpu.memory_space<vmem>>, vector<1x1x8x128xf32>
      %31 = vector.shape_cast %30 : vector<1x1x8x128xf32> to vector<8x128xf32>
      %32 = arith.addf %31, %25 : vector<8x128xf32>
      %c0_16 = arith.constant 0 : index
      %c0_17 = arith.constant 0 : index
      %c0_18 = arith.constant 0 : index
      %c0_19 = arith.constant 0 : index
      %33 = vector.load %arg4[%c0_16, %c0_17, %c0_18, %c0_19] : memref<1x2x8x128xf32, #tpu.memory_space<vmem>>, vector<1x1x8x128xf32>
      %34 = vector.shape_cast %33 : vector<1x1x8x128xf32> to vector<8x128xf32>
      %35 = vector.shape_cast %32 : vector<8x128xf32> to vector<1x1x8x128xf32>
      tpu.vector_store %arg4[%c0_16, %c0_17, %c0_18, %c0_19], %35 {strides = array<i32>} : memref<1x2x8x128xf32, #tpu.memory_space<vmem>>, vector<1x1x8x128xf32>,
      %c0_20 = arith.constant 0 : index
      %c1 = arith.constant 1 : index
      %c0_21 = arith.constant 0 : index
      %c0_22 = arith.constant 0 : index
      %36 = vector.load %arg4[%c0_20, %c1, %c0_21, %c0_22] : memref<1x2x8x128xf32, #tpu.memory_space<vmem>>, vector<1x1x8x128xf32>
      %37 = vector.shape_cast %36 : vector<1x1x8x128xf32> to vector<8x128xf32>
      %38 = arith.addf %37, %29 : vector<8x128xf32>
      %c0_23 = arith.constant 0 : index
      %c1_24 = arith.constant 1 : index
      %c0_25 = arith.constant 0 : index
      %c0_26 = arith.constant 0 : index
      %39 = vector.load %arg4[%c0_23, %c1_24, %c0_25, %c0_26] : memref<1x2x8x128xf32, #tpu.memory_space<vmem>>, vector<1x1x8x128xf32>
      %40 = vector.shape_cast %39 : vector<1x1x8x128xf32> to vector<8x128xf32>
      %41 = vector.shape_cast %38 : vector<8x128xf32> to vector<1x1x8x128xf32>
      tpu.vector_store %arg4[%c0_23, %c1_24, %c0_25, %c0_26], %41 {strides = array<i32>} : memref<1x2x8x128xf32, #tpu.memory_space<vmem>>, vector<1x1x8x128xf32>,
    } else {
    }
    %true = arith.constant true
    %10 = arith.xori %7, %true : i1
    %c1_i32_4 = arith.constant 1 : i32
    %11 = arith.cmpi slt, %4, %c1_i32_4 : i32
    %12 = arith.andi %10, %11 : i1
    %13 = arith.extui %12 : i1 to i32
    %c0_i32_5 = arith.constant 0 : i32
    %14 = arith.cmpi ne, %13, %c0_i32_5 : i32
    scf.if %14 {
      %c16_i32_6 = arith.constant 16 : i32
      %15 = arith.subi %c16_i32_6, %5 : i32
      %cst = arith.constant 0.000000e+00 : f32
      %16 = vector.broadcast %cst : f32 to vector<8x128xf32>
      %c0_i32_7 = arith.constant 0 : i32
      %c16_i32_8 = arith.constant 16 : i32
      %17 = arith.muli %c0_i32_7, %c16_i32_8 : i32
      %18 = tpu.assume_multiple %17, 16 : i32
      %19 = arith.index_cast %18 : i32 to index
      %c0 = arith.constant 0 : index
      %20 = vector.load %arg2[%19, %c0] : memref<16x128xf32, #tpu.memory_space<vmem>>, vector<16x128xf32>
      %21 = arith.index_cast %18 : i32 to index
      %c0_9 = arith.constant 0 : index
      %22 = vector.load %arg3[%21, %c0_9] : memref<16x128xf32, #tpu.memory_space<vmem>>, vector<16x128xf32>
      %23 = tpu.iota {dimensions = array<i32: 0>} : vector<16x128xi32>
      %24 = arith.subi %15, %18 : i32
      %25 = vector.broadcast %24 : i32 to vector<16x128xi32>
      %26 = arith.cmpi slt, %23, %25 : vector<16x128xi32>
      %cst_10 = arith.constant 0.000000e+00 : f32
      %27 = vector.broadcast %cst_10 : f32 to vector<16x128xf32>
      %28 = arith.select %26, %20, %27 : vector<16x128xi1>, vector<16x128xf32>
      %cst_11 = arith.constant 0.000000e+00 : f32
      %29 = vector.broadcast %cst_11 : f32 to vector<16x128xf32>
      %30 = arith.select %26, %22, %29 : vector<16x128xi1>, vector<16x128xf32>
      %31 = arith.mulf %28, %30 : vector<16x128xf32>
      %32 = vector.shape_cast %31 : vector<16x128xf32> to vector<2x8x128xf32>
      %cst_12 = arith.constant dense<0.000000e+00> : vector<8x128xf32>
      %33 = vector.multi_reduction <add>, %32, %cst_12 [0] : vector<2x8x128xf32> to vector<8x128xf32>
      %34 = arith.addf %16, %33 : vector<8x128xf32>
      %35 = arith.addf %28, %30 : vector<16x128xf32>
      %36 = vector.shape_cast %35 : vector<16x128xf32> to vector<2x8x128xf32>
      %cst_13 = arith.constant dense<0.000000e+00> : vector<8x128xf32>
      %37 = vector.multi_reduction <add>, %36, %cst_13 [0] : vector<2x8x128xf32> to vector<8x128xf32>
      %38 = arith.addf %16, %37 : vector<8x128xf32>
      %c1_i32_14 = arith.constant 1 : i32
      %c0_15 = arith.constant 0 : index
      %c0_16 = arith.constant 0 : index
      %c0_17 = arith.constant 0 : index
      %c0_18 = arith.constant 0 : index
      %39 = vector.load %arg4[%c0_15, %c0_16, %c0_17, %c0_18] : memref<1x2x8x128xf32, #tpu.memory_space<vmem>>, vector<1x1x8x128xf32>
      %40 = vector.shape_cast %39 : vector<1x1x8x128xf32> to vector<8x128xf32>
      %41 = arith.addf %40, %34 : vector<8x128xf32>
      %c0_19 = arith.constant 0 : index
      %c0_20 = arith.constant 0 : index
      %c0_21 = arith.constant 0 : index
      %c0_22 = arith.constant 0 : index
      %42 = vector.load %arg4[%c0_19, %c0_20, %c0_21, %c0_22] : memref<1x2x8x128xf32, #tpu.memory_space<vmem>>, vector<1x1x8x128xf32>
      %43 = vector.shape_cast %42 : vector<1x1x8x128xf32> to vector<8x128xf32>
      %44 = vector.shape_cast %41 : vector<8x128xf32> to vector<1x1x8x128xf32>
      tpu.vector_store %arg4[%c0_19, %c0_20, %c0_21, %c0_22], %44 {strides = array<i32>} : memref<1x2x8x128xf32, #tpu.memory_space<vmem>>, vector<1x1x8x128xf32>,
      %c0_23 = arith.constant 0 : index
      %c1 = arith.constant 1 : index
      %c0_24 = arith.constant 0 : index
      %c0_25 = arith.constant 0 : index
      %45 = vector.load %arg4[%c0_23, %c1, %c0_24, %c0_25] : memref<1x2x8x128xf32, #tpu.memory_space<vmem>>, vector<1x1x8x128xf32>
      %46 = vector.shape_cast %45 : vector<1x1x8x128xf32> to vector<8x128xf32>
      %47 = arith.addf %46, %38 : vector<8x128xf32>
      %c0_26 = arith.constant 0 : index
      %c1_27 = arith.constant 1 : index
      %c0_28 = arith.constant 0 : index
      %c0_29 = arith.constant 0 : index
      %48 = vector.load %arg4[%c0_26, %c1_27, %c0_28, %c0_29] : memref<1x2x8x128xf32, #tpu.memory_space<vmem>>, vector<1x1x8x128xf32>
      %49 = vector.shape_cast %48 : vector<1x1x8x128xf32> to vector<8x128xf32>
      %50 = vector.shape_cast %47 : vector<8x128xf32> to vector<1x1x8x128xf32>
      tpu.vector_store %arg4[%c0_26, %c1_27, %c0_28, %c0_29], %50 {strides = array<i32>} : memref<1x2x8x128xf32, #tpu.memory_space<vmem>>, vector<1x1x8x128xf32>,
    } else {
    }
    return
  }
  func.func @transform_0(%arg0: i32, %arg1: i32) -> (i32, i32) {
    %c1_i32 = arith.constant 1 : i32
    %0 = arith.muli %arg0, %c1_i32 : i32
    %1 = arith.addi %0, %arg1 : i32
    %c0_i32 = arith.constant 0 : i32
    %2 = arith.minsi %1, %c0_i32 : i32
    %c0_i32_0 = arith.constant 0 : i32
    %c0_i32_1 = arith.constant 0 : i32
    return %2, %c0_i32_0 : i32, i32
  }
  func.func @transform_1(%arg0: i32, %arg1: i32) -> (i32, i32) {
    %c1_i32 = arith.constant 1 : i32
    %0 = arith.muli %arg0, %c1_i32 : i32
    %1 = arith.addi %0, %arg1 : i32
    %c0_i32 = arith.constant 0 : i32
    %2 = arith.minsi %1, %c0_i32 : i32
    %c0_i32_0 = arith.constant 0 : i32
    %c0_i32_1 = arith.constant 0 : i32
    return %2, %c0_i32_0 : i32, i32
  }
  func.func @transform_2(%arg0: i32, %arg1: i32) -> (i32, i32, i32, i32) {
    %c0_i32 = arith.constant 0 : i32
    %c0_i32_0 = arith.constant 0 : i32
    %c0_i32_1 = arith.constant 0 : i32
    %c0_i32_2 = arith.constant 0 : i32
    return %arg0, %c0_i32, %c0_i32_0, %c0_i32_1 : i32, i32, i32, i32
  }
}

</mosaic_0001>

<llo_original>
// kernel: iou_loss.1
$region0: #{iou_loss.1}
  #allocation0 [shape = 'u32[]', space=smem, size = 0x4, offset = 0x4, fixed_abs, tag = 'smem constant byte address 0x4 - core index']
  #allocation1 [shape = 'u32[144,128]{1,0:T(1,128)}', space=vmem, size = 0x12000, scoped, tag = 'internal scratch']
  %s0 = inlined_call_operand.vmem [shape: f32[16,128], index: 0, kind: input, shape index: {}]
  %s1 = inlined_call_operand.vmem [shape: f32[16,128], index: 1, kind: input, shape index: {}]
  %s2 = inlined_call_operand.vmem [shape: f32[1,2,8,128], index: 2, kind: output, shape index: {}]
  %s3 = sld [smem:[#allocation0]]
  $region30: #{iou_loss.1} parent=0
    _
  %s5 = ssub.s32 1, %s3
  %s6 = scalar_select 0, %s5, %s3
  // Predicated region
  $region2: #{iou_loss.1} parent=0 // pred_check
    _
  $region3: #{iou_loss.1} parent=0 // pred_check_branch
    %8 = sbr.rel (0) target = $region5
  $region4: #{iou_loss.1} parent=0 // pred_region
    %s9 = sadd.s32 0, 0
    %p10 = scmp.lt.s32.totalorder %s9, 0
    %s11 = scalar_select %p10, %s9, 0
    %s12 = smul.u32 2, %s11
    %p13 = scmp.lt.s32.totalorder %s12, 1
    %s14 = scalar_select %p13, %s12, 1
    %s15 = smul.addr %s14, 8
    %s16 = scalar_lea.vmem %s0, %s15
    %s17 = sadd.s32 0, 0
    %p18 = scmp.lt.s32.totalorder %s17, 0
    %s19 = scalar_select %p18, %s17, 0
    %s20 = smul.u32 2, %s19
  $region5: #{iou_loss.1} parent=0 // pred_fallthru
    _
  // Predicated region
  $region6: #{iou_loss.1} parent=0 // pred_check
    _
  $region7: #{iou_loss.1} parent=0 // pred_check_branch
    %22 = sbr.rel (0) target = $region9
  $region8: #{iou_loss.1} parent=0 // pred_region
    %s23 = sadd.s32 0, 0
    %p24 = scmp.lt.s32.totalorder %s23, 0
    %s25 = scalar_select %p24, %s23, 0
    %s26 = smul.u32 2, %s25
    %p27 = scmp.lt.s32.totalorder %s26, 1
    %s28 = scalar_select %p27, %s26, 1
    %s29 = smul.addr %s28, 8
    %s30 = scalar_lea.vmem %s1, %s29
    %s31 = sadd.s32 0, 0
    %p32 = scmp.lt.s32.totalorder %s31, 0
    %s33 = scalar_select %p32, %s31, 0
    %s34 = smul.u32 2, %s33
  $region9: #{iou_loss.1} parent=0 // pred_fallthru
    _
  %s35 = sadd.s32 0, 0
  %p36 = scmp.lt.s32.totalorder %s35, 0
  %s37 = scalar_select %p36, %s35, 0
  %s38 = smul.u32 2, %s37
  %p39 = scmp.lt.s32.totalorder %s38, 1
  %s40 = scalar_select %p39, %s38, 1
  %s41 = smul.addr %s40, 8
  %s42 = scalar_lea.vmem %s0, %s41
  %s43 = sadd.s32 0, 0
  %p44 = scmp.lt.s32.totalorder %s43, 0
  %s45 = scalar_select %p44, %s43, 0
  %s46 = smul.u32 2, %s45
  %p47 = scmp.lt.s32.totalorder %s46, 1
  %s48 = scalar_select %p47, %s46, 1
  %s49 = smul.addr %s48, 8
  %s50 = scalar_lea.vmem %s1, %s49
  %s51 = sadd.s32 0, 0
  %p52 = scmp.lt.s32.totalorder %s51, 0
  %s53 = scalar_select %p52, %s51, 0
  %s54 = smul.u32 2, %s53
  %p55 = scmp.lt.s32.totalorder %s54, 1
  %s56 = scalar_select %p55, %s54, 1
  %s57 = smul.addr %s56, 8
  %s58 = scalar_lea.vmem %s0, %s57
  %s59 = sadd.s32 0, 0
  %p60 = scmp.lt.s32.totalorder %s59, 0
  %s61 = scalar_select %p60, %s59, 0
  %s62 = smul.u32 2, %s61
  %s63 = sadd.s32 0, 0
  %p64 = scmp.lt.s32.totalorder %s63, 0
  %s65 = scalar_select %p64, %s63, 0
  %s66 = smul.u32 2, %s65
  %p67 = scmp.lt.s32.totalorder %s66, 1
  %s68 = scalar_select %p67, %s66, 1
  %s69 = smul.addr %s68, 8
  %s70 = scalar_lea.vmem %s1, %s69
  %s71 = sadd.s32 0, 0
  %p72 = scmp.lt.s32.totalorder %s71, 0
  %s73 = scalar_select %p72, %s71, 0
  %s74 = smul.u32 2, %s73
  %p75 = scmp.eq.s32.totalorder 0, 0
  // Predicated region
  $region10: #{iou_loss.1} parent=0 // pred_check
    %p76 = pneg %p75
  $region11: #{iou_loss.1} parent=0 // pred_check_branch
    %78 = sbr.rel (%p76) target = $region13
  $region12: #{iou_loss.1} parent=0 // pred_region
    %79 = vst [vmem:[%s2] sm:$0xff] 0.0
    %80 = vst [vmem:[%s2 + $0x8] sm:$0xff] 0.0
  $region13: #{iou_loss.1} parent=0 // pred_fallthru
    _
  %s81 = sadd.s32 0, 0
  %s82 = smul.u32 %s81, 16
  %s83 = sadd.s32 %s82, 16
  %p84 = scmp.le.s32.totalorder %s83, 16
  // Predicated region
  $region14: #{iou_loss.1} parent=0 // pred_check
    %p85 = pneg %p84
  $region15: #{iou_loss.1} parent=0 // pred_check_branch
    %87 = sbr.rel (%p85) target = $region17
  $region16: #{iou_loss.1} parent=0 // pred_region
    %v88 = vld [vmem:[%s58] sm:$0xff]
    %v89 = vld [vmem:[%s58 + $0x8] sm:$0xff]
    %v90 = vld [vmem:[%s70] sm:$0xff]
    %v91 = vld [vmem:[%s70 + $0x8] sm:$0xff]
    %v92 = vmul.f32 %v88, %v90
    %v93 = vmul.f32 %v89, %v91
    %v94 = vadd.f32 %v92, %v93
    %v95 = vadd.f32 %v94, 0.0
    %v96 = vadd.f32 %v88, %v90
    %v97 = vadd.f32 %v89, %v91
    %v98 = vadd.f32 %v96, %v97
    %v99 = vadd.f32 %v98, 0.0
    %v100 = vld [vmem:[%s2] sm:$0xff]
    %v101 = vadd.f32 %v100, %v95
    %102 = vst [vmem:[%s2] sm:$0xff] %v101
    %s103 = scalar_lea.vmem %s2, 8
    %v104 = vld [vmem:[%s103] sm:$0xff]
    %v105 = vadd.f32 %v104, %v99
    %106 = vst [vmem:[%s103] sm:$0xff] %v105
  $region17: #{iou_loss.1} parent=0 // pred_fallthru
    _
  %p107 = scmp.gt.s32.totalorder %s83, 16
  %p108 = scmp.lt.s32.totalorder %s81, 1
  %p109 = pnand %p107, %p108
  %p110 = pneg %p109
  // Predicated region
  $region18: #{iou_loss.1} parent=0 // pred_check
    _
  $region19: #{iou_loss.1} parent=0 // pred_check_branch
    %112 = sbr.rel (%p109) target = $region21
  $region20: #{iou_loss.1} parent=0 // pred_region
    %s113 = ssub.s32 16, %s82
    %v114 = vld [vmem:[%s58] sm:$0xff]
    %v115 = vld [vmem:[%s58 + $0x8] sm:$0xff]
    %v116 = vld [vmem:[%s70] sm:$0xff]
    %v117 = vld [vmem:[%s70 + $0x8] sm:$0xff]
    %v118 = vlaneseq
    %v119 = vshrl.u32 %v118, 7
    %v120 = vadd.s32 %v119, 8
    %s121 = ssub.s32 %s113, 0
    %v122 = vstv %s121
    %vm123 = vcmp.lt.s32.totalorder %v119, %v122
    %vm124 = vcmp.lt.s32.totalorder %v120, %v122
    %v125 = vsel %vm123, %v114, 0.0
    %v126 = vsel %vm124, %v115, 0.0
    %v127 = vsel %vm123, %v116, 0.0
    %v128 = vsel %vm124, %v117, 0.0
    %v129 = vmul.f32 %v125, %v127
    %v130 = vmul.f32 %v126, %v128
    %v131 = vadd.f32 %v129, %v130
    %v132 = vadd.f32 %v131, 0.0
    %v133 = vadd.f32 %v125, %v127
    %v134 = vadd.f32 %v126, %v128
    %v135 = vadd.f32 %v133, %v134
    %v136 = vadd.f32 %v135, 0.0
    %v137 = vld [vmem:[%s2] sm:$0xff]
    %v138 = vadd.f32 %v137, %v132
    %139 = vst [vmem:[%s2] sm:$0xff] %v138
    %s140 = scalar_lea.vmem %s2, 8
    %v141 = vld [vmem:[%s140] sm:$0xff]
    %v142 = vadd.f32 %v141, %v136
    %143 = vst [vmem:[%s140] sm:$0xff] %v142
  $region21: #{iou_loss.1} parent=0 // pred_fallthru
    _
  // Predicated region
  $region22: #{iou_loss.1} parent=0 // pred_check
    _
  $region23: #{iou_loss.1} parent=0 // pred_check_branch
    %145 = sbr.rel (0) target = $region25
  $region24: #{iou_loss.1} parent=0 // pred_region
    _
  $region25: #{iou_loss.1} parent=0 // pred_fallthru
    _
  // Predicated region
  $region26: #{iou_loss.1} parent=0 // pred_check
    _
  $region27: #{iou_loss.1} parent=0 // pred_check_branch
    %147 = sbr.rel (0) target = $region29
  $region28: #{iou_loss.1} parent=0 // pred_region
    _
  $region29: #{iou_loss.1} parent=0 // pred_fallthru
    _

</llo_original>
